<compile_context>
chip_gen: v6e
topology: v6e:2x2x1
jax: 0.10.0
libtpu: 0.0.40
codegen_flags: <defaults>
</compile_context>

<pallas_src>
import jax
import jax.numpy as jnp
from jax import lax
from jax.experimental import pallas as pl
from jax.experimental.pallas import tpu as pltpu


def propensity_kernel(x_ref, w1_ref, b1_ref, w2_ref, b2_ref, w3_ref, b3_ref, out_ref):
    x = x_ref[...]                                                         # (TB, K)

    # Contract over K of both operands -> feature-major (H, TB) result.
    h1 = lax.dot_general(
        w1_ref[...], x, (((1,), (1,)), ((), ())),
        preferred_element_type=jnp.float32)
    h1 = jnp.maximum(h1 + b1_ref[...], 0.0)                                # relu(do1(layer1))

    h2 = jnp.dot(w2_ref[...], h1.astype(w2_ref.dtype),
                 preferred_element_type=jnp.float32) + b2_ref[...]
    h2 = jnp.maximum(h2, 0.0)                                              # relu(do2(layer2))

    logits = jnp.dot(w3_ref[...], h2.astype(w3_ref.dtype),
                     preferred_element_type=jnp.float32) + b3_ref[0]       # (1, TB)

    # sigmoid via EUP: exp + approximate reciprocal (VPU slot stays free).
    out_ref[...] = pl.reciprocal(1.0 + jnp.exp(-logits), approx=True)


def _round_up(n, m):
    return ((n + m - 1) // m) * m


def propensity_forward(x, w1, b1, w2, b2, w3, b3, *, tile_b=32768,
                       vmem_limit_bytes=48 * 1024 * 1024,
                       compute_dtype=jnp.bfloat16):
    """x: (B, input_size).

    Weights in PyTorch-native layout: w1 (H, K), w2 (H, H), w3 (1, H);
    biases as columns: b1/b2 (H, 1), b3 (1, 1).
    Returns (B, 1) f32 sigmoid propensity scores.
    """
    B, K = x.shape
    H = w1.shape[0]

    if B <= tile_b:
        # Single block covering the whole batch exactly (block dims == array
        # dims, so any B is legal; masked stores are irrelevant at this size).
        tile = B
    else:
        # Multi-step streaming path: tile is a multiple of 128 so the
        # (1, tile) output stores are full-width; the ragged last x block is
        # handled by Pallas partial-block masking (no host-side pad).
        tile = _round_up(tile_b, 128)

    n_blocks = pl.cdiv(B, tile)
    grid = (n_blocks,)
    out_len = n_blocks * tile          # output padded to whole blocks (alloc only)

    xc = x.astype(compute_dtype)       # dominant HBM stream: 32 B/row in bf16
    w1c = w1.astype(compute_dtype)
    w2c = w2.astype(compute_dtype)
    w3c = w3.astype(compute_dtype)
    b1c = b1.astype(jnp.float32)
    b2c = b2.astype(jnp.float32)
    b3c = b3.reshape(-1).astype(jnp.float32)   # (1,) SMEM scalar

    const = lambda i: (0, 0)   # weights/biases: same block every step -> VMEM resident

    itemsize = jnp.dtype(compute_dtype).itemsize
    flops = 2 * out_len * (K * H + H * H + H)
    bytes_accessed = (xc.size * itemsize + out_len * 4
                      + (w1c.size + w2c.size + w3c.size) * itemsize
                      + (b1c.size + b2c.size + b3c.size) * 4)

    out = pl.pallas_call(
        propensity_kernel,
        out_shape=jax.ShapeDtypeStruct((1, out_len), jnp.float32),
        grid=grid,
        in_specs=[
            pl.BlockSpec((tile, K), lambda i: (i, 0)),      # natural-layout x, contiguous DMA
            pl.BlockSpec((H, K), const),
            pl.BlockSpec((H, 1), const),
            pl.BlockSpec((H, H), const),
            pl.BlockSpec((H, 1), const),
            pl.BlockSpec((1, H), const),
            pl.BlockSpec(memory_space=pltpu.MemorySpace.SMEM),   # b3 scalar
        ],
        out_specs=pl.BlockSpec((1, tile), lambda i: (0, i)),     # lane-dense output
        compiler_params=pltpu.CompilerParams(
            dimension_semantics=("parallel",),                   # megacore on v7x
            vmem_limit_bytes=vmem_limit_bytes,
        ),
        cost_estimate=pl.CostEstimate(
            flops=flops,
            transcendentals=out_len,
            bytes_accessed=bytes_accessed,
        ),
    )(xc, w1c, b1c, w2c, b2c, w3c, b3c)

    return out[:, :B].T                                          # (B, 1)


def init_params(key, input_size, hidden_size):
    """Init matching the PyTorch module's shapes (PyTorch-native (out, in) layout).

    layer1/layer2 weights: kaiming_normal_(mode='fan_in') -> std = sqrt(2 / fan_in).
    layer3 weight + all biases: PyTorch Linear default U(-1/sqrt(fan_in), 1/sqrt(fan_in)).
    Biases are returned as (out, 1) columns for the feature-major kernel layout.
    """
    k1, k2, k3, kb1, kb2, kb3 = jax.random.split(key, 6)

    std1 = (2.0 / input_size) ** 0.5
    w1 = jax.random.normal(k1, (hidden_size, input_size), jnp.float32) * std1
    std2 = (2.0 / hidden_size) ** 0.5
    w2 = jax.random.normal(k2, (hidden_size, hidden_size), jnp.float32) * std2

    bound3 = 1.0 / (hidden_size ** 0.5)
    w3 = jax.random.uniform(k3, (1, hidden_size), jnp.float32, -bound3, bound3)

    bound1 = 1.0 / (input_size ** 0.5)
    b1 = jax.random.uniform(kb1, (hidden_size, 1), jnp.float32, -bound1, bound1)
    bound2 = 1.0 / (hidden_size ** 0.5)
    b2 = jax.random.uniform(kb2, (hidden_size, 1), jnp.float32, -bound2, bound2)
    b3 = jax.random.uniform(kb3, (1, 1), jnp.float32, -bound2, bound2)

    return w1, b1, w2, b2, w3, b3


if __name__ == "__main__":
    input_size = 16   # number of covariates
    hidden_size = 32
    batch = 8

    key = jax.random.PRNGKey(0)
    kx, kp = jax.random.split(key)
    x = jax.random.normal(kx, (batch, input_size), jnp.float32)
    w1, b1, w2, b2, w3, b3 = init_params(kp, input_size, hidden_size)

    def ref_fwd(xv):
        h1 = jnp.maximum(xv @ w1.T + b1.T, 0.0)
        h2 = jnp.maximum(h1 @ w2.T + b2.T, 0.0)
        return jax.nn.sigmoid(h2 @ w3.T + b3.T)

    ref = ref_fwd(x)

    # Exact-dtype path (f32 compute): only error source is the approximate
    # EUP reciprocal inside the sigmoid.
    out_f32 = jax.block_until_ready(
        propensity_forward(x, w1, b1, w2, b2, w3, b3, compute_dtype=jnp.float32))
    assert out_f32.shape == (batch, 1)
    assert jnp.allclose(out_f32, ref, atol=2e-3, rtol=2e-3)

    # Default bf16-input path (tolerance covers bf16 rounding of x/W/h).
    out_bf16 = jax.block_until_ready(propensity_forward(x, w1, b1, w2, b2, w3, b3))
    assert out_bf16.shape == (batch, 1)
    assert jnp.allclose(out_bf16, ref, atol=1e-2, rtol=1e-2)

    # Larger batch exercising the multi-step streaming grid with a ragged last
    # block (300 = 2*128 + 44): no host-side transpose or pad, the partial
    # block is masked by Pallas and padded output columns are sliced off.
    x_big = jax.random.normal(kx, (300, input_size), jnp.float32)
    out_big = jax.block_until_ready(
        propensity_forward(x_big, w1, b1, w2, b2, w3, b3, tile_b=128))
    ref_big = ref_fwd(x_big)
    assert out_big.shape == (300, 1)
    assert not jnp.any(jnp.isnan(out_big))
    assert jnp.allclose(out_big, ref_big, atol=1e-2, rtol=1e-2)

    print("KERNEL_OK")
</pallas_src>

<mosaic_0001>
module attributes {stable_mosaic.version = 11 : i64} {
  func.func @propensity_kernel(%arg0: i32, %arg1: memref<8x16xf32, #tpu.memory_space<vmem>>, %arg2: memref<32x16xf32, #tpu.memory_space<vmem>>, %arg3: memref<32x1xf32, #tpu.memory_space<vmem>>, %arg4: memref<32x32xf32, #tpu.memory_space<vmem>>, %arg5: memref<32x1xf32, #tpu.memory_space<vmem>>, %arg6: memref<1x32xf32, #tpu.memory_space<vmem>>, %arg7: memref<1xf32, #tpu.memory_space<smem>>, %arg8: memref<1x8xf32, #tpu.memory_space<vmem>>) attributes {dimension_semantics = [#tpu.dimension_semantics<parallel>], iteration_bounds = array<i64: 1>, scalar_prefetch = 0 : i64, scratch_operands = 0 : i64, tpu.core_type = #tpu.core_type<tc>, window_params = [{transform_indices = @transform_0, window_bounds = array<i64: 8, 16>}, {pipeline_mode = #tpu.pipeline_mode<synchronous>, transform_indices = @transform_1, window_bounds = array<i64: 32, 16>}, {pipeline_mode = #tpu.pipeline_mode<synchronous>, transform_indices = @transform_2, window_bounds = array<i64: 32, 1>}, {pipeline_mode = #tpu.pipeline_mode<synchronous>, transform_indices = @transform_3, window_bounds = array<i64: 32, 32>}, {pipeline_mode = #tpu.pipeline_mode<synchronous>, transform_indices = @transform_4, window_bounds = array<i64: 32, 1>}, {pipeline_mode = #tpu.pipeline_mode<synchronous>, transform_indices = @transform_5, window_bounds = array<i64: 1, 32>}, {transform_indices = @transform_6, window_bounds = array<i64: 1>}, {transform_indices = @transform_7, window_bounds = array<i64: 1, 8>}]} {
    %c0 = arith.constant 0 : index
    %c0_0 = arith.constant 0 : index
    %0 = vector.load %arg1[%c0, %c0_0] : memref<8x16xf32, #tpu.memory_space<vmem>>, vector<8x16xf32>
    %c0_1 = arith.constant 0 : index
    %c0_2 = arith.constant 0 : index
    %1 = vector.load %arg2[%c0_1, %c0_2] : memref<32x16xf32, #tpu.memory_space<vmem>>, vector<32x16xf32>
    %cst = arith.constant dense<0.000000e+00> : vector<32x8xf32>
    %2 = tpu.matmul %1, %0, %cst {dimension_numbers = #tpu.dot_dimension_numbers<[1], [1], [0], [0], [0, 0, 1, 0], [], []>} : vector<32x16xf32>, vector<8x16xf32>, vector<32x8xf32> -> vector<32x8xf32>
    %c0_3 = arith.constant 0 : index
    %c0_4 = arith.constant 0 : index
    %3 = vector.load %arg3[%c0_3, %c0_4] : memref<32x1xf32, #tpu.memory_space<vmem>>, vector<32x1xf32>
    %4 = vector.broadcast %3 : vector<32x1xf32> to vector<32x8xf32>
    %5 = arith.addf %2, %4 : vector<32x8xf32>
    %cst_5 = arith.constant 0.000000e+00 : f32
    %6 = vector.broadcast %cst_5 : f32 to vector<32x8xf32>
    %7 = arith.maximumf %5, %6 : vector<32x8xf32>
    %c0_6 = arith.constant 0 : index
    %c0_7 = arith.constant 0 : index
    %8 = vector.load %arg4[%c0_6, %c0_7] : memref<32x32xf32, #tpu.memory_space<vmem>>, vector<32x32xf32>
    %cst_8 = arith.constant dense<0.000000e+00> : vector<32x8xf32>
    %9 = tpu.matmul %8, %7, %cst_8 {dimension_numbers = #tpu.dot_dimension_numbers<[1], [0], [0], [1], [0, 0, 1, 1], [], []>} : vector<32x32xf32>, vector<32x8xf32>, vector<32x8xf32> -> vector<32x8xf32>
    %c0_9 = arith.constant 0 : index
    %c0_10 = arith.constant 0 : index
    %10 = vector.load %arg5[%c0_9, %c0_10] : memref<32x1xf32, #tpu.memory_space<vmem>>, vector<32x1xf32>
    %11 = vector.broadcast %10 : vector<32x1xf32> to vector<32x8xf32>
    %12 = arith.addf %9, %11 : vector<32x8xf32>
    %cst_11 = arith.constant 0.000000e+00 : f32
    %13 = vector.broadcast %cst_11 : f32 to vector<32x8xf32>
    %14 = arith.maximumf %12, %13 : vector<32x8xf32>
    %c0_12 = arith.constant 0 : index
    %c0_13 = arith.constant 0 : index
    %15 = vector.load %arg6[%c0_12, %c0_13] : memref<1x32xf32, #tpu.memory_space<vmem>>, vector<1x32xf32>
    %cst_14 = arith.constant dense<0.000000e+00> : vector<1x8xf32>
    %16 = tpu.matmul %15, %14, %cst_14 {dimension_numbers = #tpu.dot_dimension_numbers<[1], [0], [0], [1], [0, 0, 1, 1], [], []>} : vector<1x32xf32>, vector<32x8xf32>, vector<1x8xf32> -> vector<1x8xf32>
    %c0_15 = arith.constant 0 : index
    %17 = memref.load %arg7[%c0_15] : memref<1xf32, #tpu.memory_space<smem>>
    %18 = vector.broadcast %17 : f32 to vector<1x8xf32>
    %19 = arith.addf %16, %18 : vector<1x8xf32>
    %cst_16 = arith.constant 0.000000e+00 : f32
    %20 = vector.broadcast %cst_16 : f32 to vector<1x8xf32>
    %21 = arith.subf %20, %19 : vector<1x8xf32>
    %22 = math.exp %21 : vector<1x8xf32>
    %cst_17 = arith.constant 1.000000e+00 : f32
    %23 = vector.broadcast %cst_17 : f32 to vector<1x8xf32>
    %24 = arith.addf %23, %22 : vector<1x8xf32>
    %25 = tpu.reciprocal %24 {approx = true} : vector<1x8xf32> -> vector<1x8xf32>
    %c0_18 = arith.constant 0 : index
    %c0_19 = arith.constant 0 : index
    %26 = vector.load %arg8[%c0_18, %c0_19] : memref<1x8xf32, #tpu.memory_space<vmem>>, vector<1x8xf32>
    tpu.vector_store %arg8[%c0_18, %c0_19], %25 {strides = array<i32>} : memref<1x8xf32, #tpu.memory_space<vmem>>, vector<1x8xf32>,
    return
  }
  func.func @transform_0(%arg0: i32) -> (i32, i32) {
    %c0_i32 = arith.constant 0 : i32
    %c0_i32_0 = arith.constant 0 : i32
    return %arg0, %c0_i32 : i32, i32
  }
  func.func @transform_1(%arg0: i32) -> (i32, i32) {
    %c0_i32 = arith.constant 0 : i32
    %c0_i32_0 = arith.constant 0 : i32
    %c0_i32_1 = arith.constant 0 : i32
    return %c0_i32, %c0_i32_0 : i32, i32
  }
  func.func @transform_2(%arg0: i32) -> (i32, i32) {
    %c0_i32 = arith.constant 0 : i32
    %c0_i32_0 = arith.constant 0 : i32
    %c0_i32_1 = arith.constant 0 : i32
    return %c0_i32, %c0_i32_0 : i32, i32
  }
  func.func @transform_3(%arg0: i32) -> (i32, i32) {
    %c0_i32 = arith.constant 0 : i32
    %c0_i32_0 = arith.constant 0 : i32
    %c0_i32_1 = arith.constant 0 : i32
    return %c0_i32, %c0_i32_0 : i32, i32
  }
  func.func @transform_4(%arg0: i32) -> (i32, i32) {
    %c0_i32 = arith.constant 0 : i32
    %c0_i32_0 = arith.constant 0 : i32
    %c0_i32_1 = arith.constant 0 : i32
    return %c0_i32, %c0_i32_0 : i32, i32
  }
  func.func @transform_5(%arg0: i32) -> (i32, i32) {
    %c0_i32 = arith.constant 0 : i32
    %c0_i32_0 = arith.constant 0 : i32
    %c0_i32_1 = arith.constant 0 : i32
    return %c0_i32, %c0_i32_0 : i32, i32
  }
  func.func @transform_6(%arg0: i32) -> i32 {
    %c0_i32 = arith.constant 0 : i32
    %c0_i32_0 = arith.constant 0 : i32
    return %c0_i32 : i32
  }
  func.func @transform_7(%arg0: i32) -> (i32, i32) {
    %c0_i32 = arith.constant 0 : i32
    %c0_i32_0 = arith.constant 0 : i32
    return %c0_i32, %arg0 : i32, i32
  }
}

</mosaic_0001>

<llo_original>
// kernel: tpu_custom_call.1
$region0: #{tpu_custom_call.1}
  #allocation0 [shape = 'u32[]', space=smem, size = 0x4, offset = 0x4, fixed_abs, tag = 'smem constant byte address 0x4 - core index']
  #allocation1 [shape = 'u32[144,128]{1,0:T(1,128)}', space=vmem, size = 0x12000, scoped, tag = 'internal scratch']
  #allocation2 [shape = 'f32[1]{0:T(128)S(6)}', space=smem, size = 0x200, scoped, tag = 'scoped memory for tpu_custom_call.1']
  %s0 = inlined_call_operand.vmem [shape: f32[8,16], index: 0, kind: input, shape index: {}]
  %s1 = inlined_call_operand.vmem [shape: f32[32,16], index: 1, kind: input, shape index: {}]
  %s2 = inlined_call_operand.vmem [shape: f32[32,1], index: 2, kind: input, shape index: {}]
  %s3 = inlined_call_operand.vmem [shape: f32[32,32], index: 3, kind: input, shape index: {}]
  %s4 = inlined_call_operand.vmem [shape: f32[32,1], index: 4, kind: input, shape index: {}]
  %s5 = inlined_call_operand.vmem [shape: f32[1,32], index: 5, kind: input, shape index: {}]
  %s6 = inlined_call_operand.<no memory space> [shape: f32[1], index: 6, kind: input, shape index: {}]
  %s7 = inlined_call_operand.hbm [shape: f32[1,8], index: 7, kind: output, shape index: {}]
  %s8 = sld [smem:[#allocation0]]
  $region38: #{tpu_custom_call.1} parent=0
    _
  %s10 = ssub.s32 1, %s8
  %s11 = scalar_select 0, %s10, %s8
  %12 = sst [smem:[#allocation2]] %s6
  $region1: #{tpu_custom_call.1} parent=0
    #allocation3 [shape = 'u8[512]{0}', space=vmem, size = 0x400, scoped, tag = 'output window, operand 0, single buffered']
    #allocation4 [shape = 's32[1]{0}', space=sflag, size = 0x4, scoped, tag = 'scoped memory for tpu_custom_call.1']
    %13 = vsyncpa [#allocation4], 0
    // Predicated region
    $region2: #{tpu_custom_call.1} parent=1 // pred_check
      _
    $region3: #{tpu_custom_call.1} parent=1 // pred_check_branch
      %15 = sbr.rel (0) target = $region5
    $region4: #{tpu_custom_call.1} parent=1 // pred_region
      _
    $region5: #{tpu_custom_call.1} parent=1 // pred_fallthru
      _
    // Predicated region
    $region6: #{tpu_custom_call.1} parent=1 // pred_check
      _
    $region7: #{tpu_custom_call.1} parent=1 // pred_check_branch
      %17 = sbr.rel (0) target = $region9
    $region8: #{tpu_custom_call.1} parent=1 // pred_region
      _
    $region9: #{tpu_custom_call.1} parent=1 // pred_fallthru
      _
    // Predicated region
    $region10: #{tpu_custom_call.1} parent=1 // pred_check
      _
    $region11: #{tpu_custom_call.1} parent=1 // pred_check_branch
      %19 = sbr.rel (0) target = $region13
    $region12: #{tpu_custom_call.1} parent=1 // pred_region
      _
    $region13: #{tpu_custom_call.1} parent=1 // pred_fallthru
      _
    // Predicated region
    $region14: #{tpu_custom_call.1} parent=1 // pred_check
      _
    $region15: #{tpu_custom_call.1} parent=1 // pred_check_branch
      %21 = sbr.rel (0) target = $region17
    $region16: #{tpu_custom_call.1} parent=1 // pred_region
      _
    $region17: #{tpu_custom_call.1} parent=1 // pred_fallthru
      _
    // Predicated region
    $region18: #{tpu_custom_call.1} parent=1 // pred_check
      _
    $region19: #{tpu_custom_call.1} parent=1 // pred_check_branch
      %23 = sbr.rel (0) target = $region21
    $region20: #{tpu_custom_call.1} parent=1 // pred_region
      _
    $region21: #{tpu_custom_call.1} parent=1 // pred_fallthru
      _
    // Predicated region
    $region22: #{tpu_custom_call.1} parent=1 // pred_check
      _
    $region23: #{tpu_custom_call.1} parent=1 // pred_check_branch
      %25 = sbr.rel (0) target = $region25
    $region24: #{tpu_custom_call.1} parent=1 // pred_region
      _
    $region25: #{tpu_custom_call.1} parent=1 // pred_fallthru
      _
    // Predicated region
    $region26: #{tpu_custom_call.1} parent=1 // pred_check
      _
    $region27: #{tpu_custom_call.1} parent=1 // pred_check_branch
      %27 = sbr.rel (0) target = $region29
    $region28: #{tpu_custom_call.1} parent=1 // pred_region
      _
    $region29: #{tpu_custom_call.1} parent=1 // pred_fallthru
      _
    %v28 = vld [vmem:[%s0] sm:$0xff]
    %v29 = vld [vmem:[%s1] sm:$0xff]
    %v30 = vld [vmem:[%s1 + $0x8] sm:$0xff]
    %v31 = vld [vmem:[%s1 + $0x10] sm:$0xff]
    %v32 = vld [vmem:[%s1 + $0x18] sm:$0xff]
    %v33 = vld [vmem:[%s2] sm:$0xff]
    %v34 = vld [vmem:[%s2 + $0x8] sm:$0xff]
    %v35 = vld [vmem:[%s2 + $0x10] sm:$0xff]
    %v36 = vld [vmem:[%s2 + $0x18] sm:$0xff]
    %38 = vset.pattern.permute.xlu0 0
    %39 = vperm.xlu0 %38, %v33
    %v40 = vpop.permute.xlu0 %39
    %43 = vset.pattern.permute.xlu0 0
    %44 = vperm.xlu0 %43, %v34
    %v45 = vpop.permute.xlu0 %44
    %48 = vset.pattern.permute.xlu0 0
    %49 = vperm.xlu0 %48, %v35
    %v50 = vpop.permute.xlu0 %49
    %53 = vset.pattern.permute.xlu0 0
    %54 = vperm.xlu0 %53, %v36
    %v55 = vpop.permute.xlu0 %54
    %vm57 = vcmask 130048
    %v59 = vsel %vm57, %v29, 0
    %v62 = vsel %vm57, %v30, 0
    %v65 = vsel %vm57, %v31, 0
    %v68 = vsel %vm57, %v32, 0
    %v71 = vsel %vm57, %v28, 0
    %73 = vmatprep.subr.mxu0 0.0
    %74 = vmatpush1.xpose.msra.mxu0 0.0
    %75 = vmatprep.subr.mxu0 0.0
    %76 = vmatpush1.xpose.msra.mxu0 0.0
    %77 = vmatprep.subr.mxu0 0.0
    %78 = vmatpush1.xpose.msra.mxu0 0.0
    %79 = vmatprep.subr.mxu0 0.0
    %80 = vmatpush1.xpose.msra.mxu0 0.0
    %81 = vmatprep.subr.mxu0 0.0
    %82 = vmatpush1.xpose.msra.mxu0 0.0
    %83 = vmatprep.subr.mxu0 0.0
    %84 = vmatpush1.xpose.msra.mxu0 0.0
    %85 = vmatprep.subr.mxu0 0.0
    %86 = vmatpush1.xpose.msra.mxu0 0.0
    %87 = vmatprep.subr.mxu0 0.0
    %88 = vmatpush1.xpose.msra.mxu0 0.0
    %89 = vmatprep.subr.mxu0 0.0
    %90 = vmatpush1.xpose.msra.mxu0 0.0
    %91 = vmatprep.subr.mxu0 0.0
    %92 = vmatpush1.xpose.msra.mxu0 0.0
    %93 = vmatprep.subr.mxu0 0.0
    %94 = vmatpush1.xpose.msra.mxu0 0.0
    %95 = vmatprep.subr.mxu0 0.0
    %96 = vmatpush1.xpose.msra.mxu0 0.0
    %97 = vmatprep.subr.mxu0 0.0
    %98 = vmatpush1.xpose.msra.mxu0 0.0
    %99 = vmatprep.subr.mxu0 0.0
    %100 = vmatpush1.xpose.msra.mxu0 0.0
    %101 = vmatprep.subr.mxu0 0.0
    %102 = vmatpush1.xpose.msra.mxu0 0.0
    %103 = vmatprep.subr.mxu0 0.0
    %104 = vmatpush1.xpose.msra.mxu0 %v71
    %105 = vmatprep.subr.mxu0 0.0
    %106 = vmatpush2.xpose.msra.mxu0 0.0
    %107 = vmatprep.subr.mxu0 0.0
    %108 = vmatpush2.xpose.msra.mxu0 0.0
    %109 = vmatprep.subr.mxu0 0.0
    %110 = vmatpush2.xpose.msra.mxu0 0.0
    %111 = vmatprep.subr.mxu0 0.0
    %112 = vmatpush2.xpose.msra.mxu0 0.0
    %113 = vmatprep.subr.mxu0 0.0
    %114 = vmatpush2.xpose.msra.mxu0 0.0
    %115 = vmatprep.subr.mxu0 0.0
    %116 = vmatpush2.xpose.msra.mxu0 0.0
    %117 = vmatprep.subr.mxu0 0.0
    %118 = vmatpush2.xpose.msra.mxu0 0.0
    %119 = vmatprep.subr.mxu0 0.0
    %120 = vmatpush2.xpose.msra.mxu0 0.0
    %121 = vmatprep.subr.mxu0 0.0
    %122 = vmatpush2.xpose.msra.mxu0 0.0
    %123 = vmatprep.subr.mxu0 0.0
    %124 = vmatpush2.xpose.msra.mxu0 0.0
    %125 = vmatprep.subr.mxu0 0.0
    %126 = vmatpush2.xpose.msra.mxu0 0.0
    %127 = vmatprep.subr.mxu0 0.0
    %128 = vmatpush2.xpose.msra.mxu0 0.0
    %129 = vmatprep.subr.mxu0 0.0
    %130 = vmatpush2.xpose.msra.mxu0 0.0
    %131 = vmatprep.subr.mxu0 0.0
    %132 = vmatpush2.xpose.msra.mxu0 0.0
    %133 = vmatprep.subr.mxu0 0.0
    %134 = vmatpush2.xpose.msra.mxu0 0.0
    %135 = vmatprep.subr.mxu0 0.0
    %136 = vmatpush2.xpose.msra.mxu0 0.0
    %137 = vmatprep.mubr.f32.mxu0 0.0
    %138 = vmatmul.mubr.f32.gmra.mxu0 %v59
    %v139 = vpop.f32.mrf.mxu0
    %v140 = vadd.f32 %v40, %v139
    %v141 = vpop.f32.mrf.mxu0
    %142 = vmatprep.mubr.f32.mxu0 0.0
    %143 = vmatmul.mubr.f32.gmra.mxu0 %v62
    %v144 = vpop.f32.mrf.mxu0
    %v145 = vadd.f32 %v45, %v144
    %v146 = vpop.f32.mrf.mxu0
    %147 = vmatprep.mubr.f32.mxu0 0.0
    %148 = vmatmul.mubr.f32.gmra.mxu0 %v65
    %v149 = vpop.f32.mrf.mxu0
    %v150 = vadd.f32 %v50, %v149
    %v151 = vpop.f32.mrf.mxu0
    %152 = vmatprep.mubr.f32.mxu0 0.0
    %153 = vmatmul.mubr.f32.gmra.mxu0 %v68
    %v154 = vpop.f32.mrf.mxu0
    %v155 = vadd.f32 %v55, %v154
    %v156 = vpop.f32.mrf.mxu0
    %157 = vdwg.mxu0
    %v158 = vmax.f32 %v140, 0.0
    %v159 = vmax.f32 %v145, 0.0
    %v160 = vmax.f32 %v150, 0.0
    %v161 = vmax.f32 %v155, 0.0
    %v162 = vld [vmem:[%s3] sm:$0xff]
    %v163 = vld [vmem:[%s3 + $0x8] sm:$0xff]
    %v164 = vld [vmem:[%s3 + $0x10] sm:$0xff]
    %v165 = vld [vmem:[%s3 + $0x18] sm:$0xff]
    %v166 = vld [vmem:[%s4] sm:$0xff]
    %v167 = vld [vmem:[%s4 + $0x8] sm:$0xff]
    %v168 = vld [vmem:[%s4 + $0x10] sm:$0xff]
    %v169 = vld [vmem:[%s4 + $0x18] sm:$0xff]
    %171 = vset.pattern.permute.xlu0 0
    %172 = vperm.xlu0 %171, %v166
    %v173 = vpop.permute.xlu0 %172
    %176 = vset.pattern.permute.xlu0 0
    %177 = vperm.xlu0 %176, %v167
    %v178 = vpop.permute.xlu0 %177
    %181 = vset.pattern.permute.xlu0 0
    %182 = vperm.xlu0 %181, %v168
    %v183 = vpop.permute.xlu0 %182
    %186 = vset.pattern.permute.xlu0 0
    %187 = vperm.xlu0 %186, %v169
    %v188 = vpop.permute.xlu0 %187
    %vm190 = vcmask 261120
    %v192 = vsel %vm190, %v162, 0
    %v195 = vsel %vm190, %v163, 0
    %v198 = vsel %vm190, %v164, 0
    %v201 = vsel %vm190, %v165, 0
    %203 = vmatprep.subr.mxu0 0.0
    %204 = vmatpush1.msra.mxu0 0.0
    %205 = vmatprep.subr.mxu0 0.0
    %206 = vmatpush1.msra.mxu0 0.0
    %207 = vmatprep.subr.mxu0 0.0
    %208 = vmatpush1.msra.mxu0 0.0
    %209 = vmatprep.subr.mxu0 0.0
    %210 = vmatpush1.msra.mxu0 0.0
    %211 = vmatprep.subr.mxu0 0.0
    %212 = vmatpush1.msra.mxu0 0.0
    %213 = vmatprep.subr.mxu0 0.0
    %214 = vmatpush1.msra.mxu0 0.0
    %215 = vmatprep.subr.mxu0 0.0
    %216 = vmatpush1.msra.mxu0 0.0
    %217 = vmatprep.subr.mxu0 0.0
    %218 = vmatpush1.msra.mxu0 0.0
    %219 = vmatprep.subr.mxu0 0.0
    %220 = vmatpush1.msra.mxu0 0.0
    %221 = vmatprep.subr.mxu0 0.0
    %222 = vmatpush1.msra.mxu0 0.0
    %223 = vmatprep.subr.mxu0 0.0
    %224 = vmatpush1.msra.mxu0 0.0
    %225 = vmatprep.subr.mxu0 0.0
    %226 = vmatpush1.msra.mxu0 0.0
    %227 = vmatprep.subr.mxu0 0.0
    %228 = vmatpush1.msra.mxu0 %v161
    %229 = vmatprep.subr.mxu0 0.0
    %230 = vmatpush1.msra.mxu0 %v160
    %231 = vmatprep.subr.mxu0 0.0
    %232 = vmatpush1.msra.mxu0 %v159
    %233 = vmatprep.subr.mxu0 0.0
    %234 = vmatpush1.msra.mxu0 %v158
    %235 = vmatprep.subr.mxu0 0.0
    %236 = vmatpush2.msra.mxu0 0.0
    %237 = vmatprep.subr.mxu0 0.0
    %238 = vmatpush2.msra.mxu0 0.0
    %239 = vmatprep.subr.mxu0 0.0
    %240 = vmatpush2.msra.mxu0 0.0
    %241 = vmatprep.subr.mxu0 0.0
    %242 = vmatpush2.msra.mxu0 0.0
    %243 = vmatprep.subr.mxu0 0.0
    %244 = vmatpush2.msra.mxu0 0.0
    %245 = vmatprep.subr.mxu0 0.0
    %246 = vmatpush2.msra.mxu0 0.0
    %247 = vmatprep.subr.mxu0 0.0
    %248 = vmatpush2.msra.mxu0 0.0
    %249 = vmatprep.subr.mxu0 0.0
    %250 = vmatpush2.msra.mxu0 0.0
    %251 = vmatprep.subr.mxu0 0.0
    %252 = vmatpush2.msra.mxu0 0.0
    %253 = vmatprep.subr.mxu0 0.0
    %254 = vmatpush2.msra.mxu0 0.0
    %255 = vmatprep.subr.mxu0 0.0
    %256 = vmatpush2.msra.mxu0 0.0
    %257 = vmatprep.subr.mxu0 0.0
    %258 = vmatpush2.msra.mxu0 0.0
    %259 = vmatprep.subr.mxu0 0.0
    %260 = vmatpush2.msra.mxu0 0.0
    %261 = vmatprep.subr.mxu0 0.0
    %262 = vmatpush2.msra.mxu0 0.0
    %263 = vmatprep.subr.mxu0 0.0
    %264 = vmatpush2.msra.mxu0 0.0
    %265 = vmatprep.subr.mxu0 0.0
    %266 = vmatpush2.msra.mxu0 0.0
    %267 = vmatprep.mubr.f32.mxu0 0.0
    %268 = vmatmul.mubr.f32.gmra.mxu0 %v192
    %v269 = vpop.f32.mrf.mxu0
    %v270 = vadd.f32 %v173, %v269
    %v271 = vpop.f32.mrf.mxu0
    %272 = vmatprep.mubr.f32.mxu0 0.0
    %273 = vmatmul.mubr.f32.gmra.mxu0 %v195
    %v274 = vpop.f32.mrf.mxu0
    %v275 = vadd.f32 %v178, %v274
    %v276 = vpop.f32.mrf.mxu0
    %277 = vmatprep.mubr.f32.mxu0 0.0
    %278 = vmatmul.mubr.f32.gmra.mxu0 %v198
    %v279 = vpop.f32.mrf.mxu0
    %v280 = vadd.f32 %v183, %v279
    %v281 = vpop.f32.mrf.mxu0
    %282 = vmatprep.mubr.f32.mxu0 0.0
    %283 = vmatmul.mubr.f32.gmra.mxu0 %v201
    %v284 = vpop.f32.mrf.mxu0
    %v285 = vadd.f32 %v188, %v284
    %v286 = vpop.f32.mrf.mxu0
    %287 = vdwg.mxu0
    %v288 = vmax.f32 %v270, 0.0
    %v289 = vmax.f32 %v275, 0.0
    %v290 = vmax.f32 %v280, 0.0
    %v291 = vmax.f32 %v285, 0.0
    %v292 = vld [vmem:[%s5] sm:$0x1]
    %s293 = sld [smem:[#allocation2]]
    %v294 = vstv %s293
    %v296 = vsel %vm190, %v292, 0
    %298 = vmatprep.subr.mxu0 0.0
    %299 = vmatpush1.msra.mxu0 0.0
    %300 = vmatprep.subr.mxu0 0.0
    %301 = vmatpush1.msra.mxu0 0.0
    %302 = vmatprep.subr.mxu0 0.0
    %303 = vmatpush1.msra.mxu0 0.0
    %304 = vmatprep.subr.mxu0 0.0
    %305 = vmatpush1.msra.mxu0 0.0
    %306 = vmatprep.subr.mxu0 0.0
    %307 = vmatpush1.msra.mxu0 0.0
    %308 = vmatprep.subr.mxu0 0.0
    %309 = vmatpush1.msra.mxu0 0.0
    %310 = vmatprep.subr.mxu0 0.0
    %311 = vmatpush1.msra.mxu0 0.0
    %312 = vmatprep.subr.mxu0 0.0
    %313 = vmatpush1.msra.mxu0 0.0
    %314 = vmatprep.subr.mxu0 0.0
    %315 = vmatpush1.msra.mxu0 0.0
    %316 = vmatprep.subr.mxu0 0.0
    %317 = vmatpush1.msra.mxu0 0.0
    %318 = vmatprep.subr.mxu0 0.0
    %319 = vmatpush1.msra.mxu0 0.0
    %320 = vmatprep.subr.mxu0 0.0
    %321 = vmatpush1.msra.mxu0 0.0
    %322 = vmatprep.subr.mxu0 0.0
    %323 = vmatpush1.msra.mxu0 %v291
    %324 = vmatprep.subr.mxu0 0.0
    %325 = vmatpush1.msra.mxu0 %v290
    %326 = vmatprep.subr.mxu0 0.0
    %327 = vmatpush1.msra.mxu0 %v289
    %328 = vmatprep.subr.mxu0 0.0
    %329 = vmatpush1.msra.mxu0 %v288
    %330 = vmatprep.subr.mxu0 0.0
    %331 = vmatpush2.msra.mxu0 0.0
    %332 = vmatprep.subr.mxu0 0.0
    %333 = vmatpush2.msra.mxu0 0.0
    %334 = vmatprep.subr.mxu0 0.0
    %335 = vmatpush2.msra.mxu0 0.0
    %336 = vmatprep.subr.mxu0 0.0
    %337 = vmatpush2.msra.mxu0 0.0
    %338 = vmatprep.subr.mxu0 0.0
    %339 = vmatpush2.msra.mxu0 0.0
    %340 = vmatprep.subr.mxu0 0.0
    %341 = vmatpush2.msra.mxu0 0.0
    %342 = vmatprep.subr.mxu0 0.0
    %343 = vmatpush2.msra.mxu0 0.0
    %344 = vmatprep.subr.mxu0 0.0
    %345 = vmatpush2.msra.mxu0 0.0
    %346 = vmatprep.subr.mxu0 0.0
    %347 = vmatpush2.msra.mxu0 0.0
    %348 = vmatprep.subr.mxu0 0.0
    %349 = vmatpush2.msra.mxu0 0.0
    %350 = vmatprep.subr.mxu0 0.0
    %351 = vmatpush2.msra.mxu0 0.0
    %352 = vmatprep.subr.mxu0 0.0
    %353 = vmatpush2.msra.mxu0 0.0
    %354 = vmatprep.subr.mxu0 0.0
    %355 = vmatpush2.msra.mxu0 0.0
    %356 = vmatprep.subr.mxu0 0.0
    %357 = vmatpush2.msra.mxu0 0.0
    %358 = vmatprep.subr.mxu0 0.0
    %359 = vmatpush2.msra.mxu0 0.0
    %360 = vmatprep.subr.mxu0 0.0
    %361 = vmatpush2.msra.mxu0 0.0
    %362 = vmatprep.mubr.f32.mxu0 0.0
    %363 = vmatmul.mubr.f32.gmra.mxu0 %v296
    %v364 = vpop.f32.mrf.mxu0
    %v365 = vadd.f32 %v294, %v364
    %v366 = vpop.f32.mrf.mxu0
    %367 = vdwg.mxu0
    %v368 = vsub.f32 0.0, %v365
    %v369 = vmul.f32 %v368, 1.442695
    %v370 = vpow.pop %v369
    %v371 = vadd.f32 %v370, 1.0
    %v372 = vrcp.pop %v371
    %vm373 = vcmask 57344
    %374 = vst.msk [vmem:[#allocation3] sm:$0x1] %vm373, %v372
    // Predicated region
    $region30: #{tpu_custom_call.1} parent=1 // pred_check
      _
    $region31: #{tpu_custom_call.1} parent=1 // pred_check_branch
      %376 = sbr.rel (0) target = $region33
    $region32: #{tpu_custom_call.1} parent=1 // pred_region
      %s378 = ssub.s32 16, 16
      %379 = vsyncadd [#allocation4], %s378
      %s381 = sshll.u32 [#allocation3], 4
      %s382 = int_to_ptr.vmem [resolvable:$true] %s381
      %384 = dma.vmem_to_hbm [thread:$0]  %s382, 16, %s7, [#allocation4]
    $region33: #{tpu_custom_call.1} parent=1 // pred_fallthru
      _
    // Predicated region
    $region34: #{tpu_custom_call.1} parent=1 // pred_check
      _
    $region35: #{tpu_custom_call.1} parent=1 // pred_check_branch
      %386 = sbr.rel (0) target = $region37
    $region36: #{tpu_custom_call.1} parent=1 // pred_region
      %387 = dma.done [#allocation4], 16
    $region37: #{tpu_custom_call.1} parent=1 // pred_fallthru
      _
    %388 = vsyncpa [#allocation4], 1

</llo_original>
